<compile_context>
chip_gen: v7x
topology: tpu7x:2x2x1
jax: 0.10.0
libtpu: 0.0.40
codegen_flags: <defaults>
</compile_context>

<pallas_src>
import jax
import jax.numpy as jnp
from jax.experimental import pallas as pl
from jax.experimental.pallas import tpu as pltpu

SUBGRAPH_SIZE = 4
LANES = 128


# ----------------------- anchor / bilinear-folded kernel ---------------------

def _anchor_kernel(anchf_ref, w_ref, b_ref, wbilT_ref, scal_ref, u_ref):
    """u = l2_normalize(prelu(anchor_feat @ W + bias)) @ Wbil^T   -> [B, D].

    Computed once; shared by the positive and negative branches.
    """
    alpha = scal_ref[0]

    a = jnp.dot(anchf_ref[...], w_ref[...],
                preferred_element_type=jnp.float32) + b_ref[...]          # [B, D]
    a = jnp.where(a > 0, a, alpha * a)                                    # PReLU
    ss = jnp.sum(a * a, axis=1, keepdims=True)
    a_n = a * jax.lax.rsqrt(jnp.maximum(ss, 1e-24))                       # F.normalize
    u_ref[...] = jnp.dot(a_n, wbilT_ref[...],
                         preferred_element_type=jnp.float32)              # [B, D]


# ------------------------------ branch kernel --------------------------------

def _cola_branch_kernel(feat_ref, adj_ref, pmat_ref, u_ref, w_ref, b_ref,
                        scal_ref, out_ref):
    """One grid step handles one branch (p=0: positive graph, p=1: negative).

    feat_ref : [1, N, F]   node features of this branch's batched graph
    adj_ref  : [1, N, N]   dense weighted adjacency adj[dst, src]
    pmat_ref : [B, N]      constant average-pooling matrix (1/S on own subgraph)
    u_ref    : [B, D]      precomputed anchor term (bilinear folded in)
    w_ref    : [F, D]      GCN weight
    b_ref    : [1, D]      GCN bias
    scal_ref : SMEM [2]    [prelu_alpha, bilinear_bias]
    out_ref  : [1, B, 128] lane-dense score slab (score broadcast over lanes)
    """
    alpha = scal_ref[0]
    bil_b = scal_ref[1]

    feat = feat_ref[0]                                  # [N, F]
    adj = adj_ref[0]                                    # [N, N]
    W = w_ref[...]                                      # [F, D]
    bias = b_ref[...]                                   # [1, D]

    N = feat.shape[0]
    D = W.shape[1]
    S = SUBGRAPH_SIZE

    # ---- one-layer GCN on this branch ----------------------------------------
    x = jnp.dot(feat, W, preferred_element_type=jnp.float32)              # [N, D]

    # Zeroing anchor node features == zeroing their rows of x (src % S == 0).
    row = jax.lax.broadcasted_iota(jnp.int32, (N, D), 0)
    x = jnp.where(row % S == 0, jnp.float32(0.0), x)

    # GraphConv(norm='none') weighted sum: h[dst] = sum_src adj[dst,src] * x[src]
    h = jnp.dot(adj, x, preferred_element_type=jnp.float32)               # [N, D]
    h = h + bias
    h = jnp.where(h > 0, h, alpha * h)                                    # PReLU

    # AvgPooling over each subgraph via the precomputed pooling matmul.
    pool = jnp.dot(pmat_ref[...], h, preferred_element_type=jnp.float32)  # [B, D]
    ss = jnp.sum(pool * pool, axis=1, keepdims=True)
    pool_n = pool * jax.lax.rsqrt(jnp.maximum(ss, 1e-24))                 # [B, D]

    # ---- bilinear discriminator (weight already folded into u) ---------------
    score = jnp.sum(pool_n * u_ref[...], axis=1, keepdims=True) + bil_b   # [B, 1]

    # Lane-dense unmasked store: broadcast [B,1] scores across the 128 lanes.
    out_ref[0] = jnp.broadcast_to(score, (pool_n.shape[0], LANES))


# ----------------------------- wrapper ---------------------------------------

def cola_forward(pos_feat, pos_adj, neg_feat, neg_adj, params):
    """params = (W[F,D], bias[1,D], alpha scalar, Wbil[D,D], bbil scalar)."""
    W, bias, alpha, Wbil, bbil = params
    N, F = pos_feat.shape
    D = W.shape[1]
    S = SUBGRAPH_SIZE
    B = N // S

    feat_s = jnp.stack([pos_feat, neg_feat])            # [2, N, F]
    adj_s = jnp.stack([pos_adj, neg_adj])               # [2, N, N]
    anchor_feat = pos_feat[0::S]                        # [B, F] (bg.ndata['feat'][::4])
    scal = jnp.stack([alpha, bbil]).astype(jnp.float32)  # [2] -> SMEM
    WbilT = Wbil.T                                      # fold bilinear onto anchor side

    # Constant average-pooling matrix: pmat[b, n] = 1/S if n // S == b else 0.
    pmat = jnp.repeat(jnp.eye(B, dtype=jnp.float32), S, axis=1) * (1.0 / S)  # [B, N]

    # ---- shared anchor term, computed once -----------------------------------
    u = pl.pallas_call(
        _anchor_kernel,
        out_shape=jax.ShapeDtypeStruct((B, D), jnp.float32),
        in_specs=[
            pl.BlockSpec(memory_space=pltpu.MemorySpace.VMEM),   # anchor_feat
            pl.BlockSpec(memory_space=pltpu.MemorySpace.VMEM),   # W
            pl.BlockSpec(memory_space=pltpu.MemorySpace.VMEM),   # bias
            pl.BlockSpec(memory_space=pltpu.MemorySpace.VMEM),   # Wbil^T
            pl.BlockSpec(memory_space=pltpu.MemorySpace.SMEM),   # [alpha, bbil]
        ],
        out_specs=pl.BlockSpec(memory_space=pltpu.MemorySpace.VMEM),
    )(anchor_feat, W, bias, WbilT, scal)

    # ---- pos / neg branches on a 2-step parallel grid -------------------------
    grid_spec = pltpu.PrefetchScalarGridSpec(
        num_scalar_prefetch=0,
        grid=(2,),                                      # pos / neg branch
        in_specs=[
            pl.BlockSpec((1, N, F), lambda p: (p, 0, 0)),
            pl.BlockSpec((1, N, N), lambda p: (p, 0, 0)),
            pl.BlockSpec((B, N), lambda p: (0, 0)),
            pl.BlockSpec((B, D), lambda p: (0, 0)),
            pl.BlockSpec((F, D), lambda p: (0, 0)),
            pl.BlockSpec((1, D), lambda p: (0, 0)),
            pl.BlockSpec(memory_space=pltpu.MemorySpace.SMEM),
        ],
        out_specs=pl.BlockSpec((1, B, LANES), lambda p: (p, 0, 0)),
    )

    out = pl.pallas_call(
        _cola_branch_kernel,
        out_shape=jax.ShapeDtypeStruct((2, B, LANES), jnp.float32),
        grid_spec=grid_spec,
        compiler_params=pltpu.CompilerParams(
            dimension_semantics=("parallel",)),         # v7x: pos/neg on both TCs
    )(feat_s, adj_s, pmat, u, W, bias, scal)

    scores = out[:, :, 0]                               # [2, B]
    return scores[0], scores[1]


# ----------------------------- reference (pure JAX) ---------------------------

def cola_forward_ref(pos_feat, pos_adj, neg_feat, neg_adj, params, S=SUBGRAPH_SIZE):
    W, bias, alpha, Wbil, bbil = params

    def prelu(x):
        return jnp.where(x > 0, x, alpha * x)

    def l2n(v):
        n = jnp.sqrt(jnp.sum(v * v, axis=1, keepdims=True))
        return v / jnp.maximum(n, 1e-12)

    # anchor_embs = bg.ndata['feat'][::4] of the positive graph
    anchor = pos_feat[0::S]
    anchor_out = l2n(prelu(anchor @ W + bias))

    def gcn(feat, adj):
        featz = feat.at[0::S].set(0.0)                  # zero anchor node features
        x = featz @ W
        h = prelu(adj @ x + bias)                       # GraphConv norm='none', weighted sum
        pool = h.reshape(-1, S, h.shape[-1]).mean(axis=1)
        return l2n(pool)

    def disc(x1, x2):
        return jnp.sum((x1 @ Wbil) * x2, axis=1) + bbil

    pos_pool = gcn(pos_feat, pos_adj)
    neg_pool = gcn(neg_feat, neg_adj)
    return disc(pos_pool, anchor_out), disc(neg_pool, anchor_out)


# ----------------------------- main -------------------------------------------

if __name__ == "__main__":
    S = SUBGRAPH_SIZE
    B = 8            # subgraphs in the batch
    N = B * S        # nodes in the dense batched graph
    F = 32           # in_feats
    D = 32           # out_feats

    key = jax.random.PRNGKey(0)
    k_fp, k_fn, k_ap, k_an, k_w, k_wb = jax.random.split(key, 6)

    pos_feat = jax.random.normal(k_fp, (N, F), dtype=jnp.float32)
    neg_feat = jax.random.normal(k_fn, (N, F), dtype=jnp.float32)

    def block_diag_adj(k):
        # dense block-diagonal weighted adjacency of the batched subgraphs
        blocks = jax.random.uniform(k, (B, S, S), dtype=jnp.float32)
        adj = jnp.zeros((N, N), dtype=jnp.float32)
        for b in range(B):
            adj = adj.at[b * S:(b + 1) * S, b * S:(b + 1) * S].set(blocks[b])
        return adj

    pos_adj = block_diag_adj(k_ap)
    neg_adj = block_diag_adj(k_an)

    # Parameter init mirroring the PyTorch module:
    #   GCN weight xavier_uniform, GCN bias zeros, PReLU slope 0.25,
    #   Bilinear weight xavier_uniform (torch shape (1, D, D)), Bilinear bias zeros.
    gcn_bound = (6.0 / (F + D)) ** 0.5
    W = jax.random.uniform(k_w, (F, D), minval=-gcn_bound, maxval=gcn_bound,
                           dtype=jnp.float32)
    bias = jnp.zeros((1, D), dtype=jnp.float32)
    alpha = jnp.float32(0.25)
    bil_bound = (6.0 / (D * D + D)) ** 0.5
    Wbil = jax.random.uniform(k_wb, (D, D), minval=-bil_bound, maxval=bil_bound,
                              dtype=jnp.float32)
    bbil = jnp.float32(0.0)
    params = (W, bias, alpha, Wbil, bbil)

    pos_scores, neg_scores = jax.block_until_ready(
        jax.jit(cola_forward)(pos_feat, pos_adj, neg_feat, neg_adj, params))

    pos_ref, neg_ref = cola_forward_ref(pos_feat, pos_adj, neg_feat, neg_adj, params)
    assert pos_scores.shape == (B,) and neg_scores.shape == (B,)
    assert jnp.allclose(pos_scores, pos_ref, rtol=1e-4, atol=1e-4)
    assert jnp.allclose(neg_scores, neg_ref, rtol=1e-4, atol=1e-4)

    print("KERNEL_OK")
</pallas_src>

<mosaic_0001>
module attributes {stable_mosaic.version = 11 : i64} {
  func.func @_anchor_kernel(%arg0: memref<8x32xf32, #tpu.memory_space<vmem>>, %arg1: memref<32x32xf32, #tpu.memory_space<vmem>>, %arg2: memref<1x32xf32, #tpu.memory_space<vmem>>, %arg3: memref<32x32xf32, #tpu.memory_space<vmem>>, %arg4: memref<2xf32, #tpu.memory_space<smem>>, %arg5: memref<8x32xf32, #tpu.memory_space<vmem>>) attributes {dimension_semantics = [], scalar_prefetch = 0 : i64, scratch_operands = 0 : i64, tpu.core_type = #tpu.core_type<tc>} {
    %c0 = arith.constant 0 : index
    %0 = memref.load %arg4[%c0] : memref<2xf32, #tpu.memory_space<smem>>
    %c0_0 = arith.constant 0 : index
    %c0_1 = arith.constant 0 : index
    %1 = vector.load %arg0[%c0_0, %c0_1] : memref<8x32xf32, #tpu.memory_space<vmem>>, vector<8x32xf32>
    %c0_2 = arith.constant 0 : index
    %c0_3 = arith.constant 0 : index
    %2 = vector.load %arg1[%c0_2, %c0_3] : memref<32x32xf32, #tpu.memory_space<vmem>>, vector<32x32xf32>
    %cst = arith.constant dense<0.000000e+00> : vector<8x32xf32>
    %3 = tpu.matmul %1, %2, %cst {dimension_numbers = #tpu.dot_dimension_numbers<[1], [0], [0], [1], [0, 0, 1, 1], [], []>} : vector<8x32xf32>, vector<32x32xf32>, vector<8x32xf32> -> vector<8x32xf32>
    %c0_4 = arith.constant 0 : index
    %c0_5 = arith.constant 0 : index
    %4 = vector.load %arg2[%c0_4, %c0_5] : memref<1x32xf32, #tpu.memory_space<vmem>>, vector<1x32xf32>
    %5 = vector.broadcast %4 : vector<1x32xf32> to vector<8x32xf32>
    %6 = arith.addf %3, %5 : vector<8x32xf32>
    %cst_6 = arith.constant 0.000000e+00 : f32
    %7 = vector.broadcast %cst_6 : f32 to vector<8x32xf32>
    %8 = arith.cmpf ogt, %6, %7 : vector<8x32xf32>
    %9 = vector.broadcast %0 : f32 to vector<8x32xf32>
    %10 = arith.mulf %9, %6 : vector<8x32xf32>
    %11 = arith.select %8, %6, %10 : vector<8x32xi1>, vector<8x32xf32>
    %12 = arith.mulf %11, %11 : vector<8x32xf32>
    %cst_7 = arith.constant dense<0.000000e+00> : vector<8xf32>
    %13 = vector.multi_reduction <add>, %12, %cst_7 [1] : vector<8x32xf32> to vector<8xf32>
    %14 = vector.shape_cast %13 : vector<8xf32> to vector<8x1xf32>
    %cst_8 = arith.constant 1.000000e-24 : f32
    %15 = vector.broadcast %cst_8 : f32 to vector<8x1xf32>
    %16 = arith.maximumf %14, %15 : vector<8x1xf32>
    %17 = math.rsqrt %16 : vector<8x1xf32>
    %18 = vector.broadcast %17 : vector<8x1xf32> to vector<8x32xf32>
    %19 = arith.mulf %11, %18 : vector<8x32xf32>
    %c0_9 = arith.constant 0 : index
    %c0_10 = arith.constant 0 : index
    %20 = vector.load %arg3[%c0_9, %c0_10] : memref<32x32xf32, #tpu.memory_space<vmem>>, vector<32x32xf32>
    %cst_11 = arith.constant dense<0.000000e+00> : vector<8x32xf32>
    %21 = tpu.matmul %19, %20, %cst_11 {dimension_numbers = #tpu.dot_dimension_numbers<[1], [0], [0], [1], [0, 0, 1, 1], [], []>} : vector<8x32xf32>, vector<32x32xf32>, vector<8x32xf32> -> vector<8x32xf32>
    %c0_12 = arith.constant 0 : index
    %c0_13 = arith.constant 0 : index
    %22 = vector.load %arg5[%c0_12, %c0_13] : memref<8x32xf32, #tpu.memory_space<vmem>>, vector<8x32xf32>
    tpu.vector_store %arg5[%c0_12, %c0_13], %21 {strides = array<i32>} : memref<8x32xf32, #tpu.memory_space<vmem>>, vector<8x32xf32>,
    return
  }
}

module attributes {stable_mosaic.version = 11 : i64} {
  func.func @_cola_branch_kernel(%arg0: i32, %arg1: memref<1x32x32xf32, #tpu.memory_space<vmem>>, %arg2: memref<1x32x32xf32, #tpu.memory_space<vmem>>, %arg3: memref<8x32xf32, #tpu.memory_space<vmem>>, %arg4: memref<8x32xf32, #tpu.memory_space<vmem>>, %arg5: memref<32x32xf32, #tpu.memory_space<vmem>>, %arg6: memref<1x32xf32, #tpu.memory_space<vmem>>, %arg7: memref<2xf32, #tpu.memory_space<smem>>, %arg8: memref<1x8x128xf32, #tpu.memory_space<vmem>>) attributes {dimension_semantics = [#tpu.dimension_semantics<parallel>], iteration_bounds = array<i64: 2>, scalar_prefetch = 0 : i64, scratch_operands = 0 : i64, tpu.core_type = #tpu.core_type<tc>, window_params = [{transform_indices = @transform_0, window_bounds = array<i64: 1, 32, 32>}, {transform_indices = @transform_1, window_bounds = array<i64: 1, 32, 32>}, {pipeline_mode = #tpu.pipeline_mode<synchronous>, transform_indices = @transform_2, window_bounds = array<i64: 8, 32>}, {pipeline_mode = #tpu.pipeline_mode<synchronous>, transform_indices = @transform_3, window_bounds = array<i64: 8, 32>}, {pipeline_mode = #tpu.pipeline_mode<synchronous>, transform_indices = @transform_4, window_bounds = array<i64: 32, 32>}, {pipeline_mode = #tpu.pipeline_mode<synchronous>, transform_indices = @transform_5, window_bounds = array<i64: 1, 32>}, {transform_indices = @transform_6, window_bounds = array<i64: 2>}, {transform_indices = @transform_7, window_bounds = array<i64: 1, 8, 128>}]} {
    %c0 = arith.constant 0 : index
    %0 = memref.load %arg7[%c0] : memref<2xf32, #tpu.memory_space<smem>>
    %c1 = arith.constant 1 : index
    %1 = memref.load %arg7[%c1] : memref<2xf32, #tpu.memory_space<smem>>
    %c0_0 = arith.constant 0 : index
    %c0_1 = arith.constant 0 : index
    %c0_2 = arith.constant 0 : index
    %2 = vector.load %arg1[%c0_0, %c0_1, %c0_2] : memref<1x32x32xf32, #tpu.memory_space<vmem>>, vector<1x32x32xf32>
    %3 = vector.shape_cast %2 : vector<1x32x32xf32> to vector<32x32xf32>
    %c0_3 = arith.constant 0 : index
    %c0_4 = arith.constant 0 : index
    %c0_5 = arith.constant 0 : index
    %4 = vector.load %arg2[%c0_3, %c0_4, %c0_5] : memref<1x32x32xf32, #tpu.memory_space<vmem>>, vector<1x32x32xf32>
    %5 = vector.shape_cast %4 : vector<1x32x32xf32> to vector<32x32xf32>
    %c0_6 = arith.constant 0 : index
    %c0_7 = arith.constant 0 : index
    %6 = vector.load %arg5[%c0_6, %c0_7] : memref<32x32xf32, #tpu.memory_space<vmem>>, vector<32x32xf32>
    %c0_8 = arith.constant 0 : index
    %c0_9 = arith.constant 0 : index
    %7 = vector.load %arg6[%c0_8, %c0_9] : memref<1x32xf32, #tpu.memory_space<vmem>>, vector<1x32xf32>
    %cst = arith.constant dense<0.000000e+00> : vector<32x32xf32>
    %8 = tpu.matmul %3, %6, %cst {dimension_numbers = #tpu.dot_dimension_numbers<[1], [0], [0], [1], [0, 0, 1, 1], [], []>} : vector<32x32xf32>, vector<32x32xf32>, vector<32x32xf32> -> vector<32x32xf32>
    %9 = tpu.iota {dimensions = array<i32: 0>} : vector<32x32xi32>
    %c4_i32 = arith.constant 4 : i32
    %c0_i32 = arith.constant 0 : i32
    %10 = arith.cmpi eq, %c4_i32, %c0_i32 : i32
    %c1_i32 = arith.constant 1 : i32
    %11 = arith.select %10, %c1_i32, %c4_i32 : i32
    %12 = vector.broadcast %11 : i32 to vector<32x32xi32>
    %13 = arith.remsi %9, %12 : vector<32x32xi32>
    %c0_i32_10 = arith.constant 0 : i32
    %14 = vector.broadcast %c0_i32_10 : i32 to vector<32x32xi32>
    %15 = arith.cmpi ne, %13, %14 : vector<32x32xi32>
    %c0_i32_11 = arith.constant 0 : i32
    %16 = vector.broadcast %c0_i32_11 : i32 to vector<32x32xi32>
    %17 = arith.cmpi slt, %13, %16 : vector<32x32xi32>
    %c0_i32_12 = arith.constant 0 : i32
    %18 = arith.cmpi slt, %11, %c0_i32_12 : i32
    %19 = vector.broadcast %18 : i1 to vector<32x32xi1>
    %20 = vector.broadcast %19 : vector<32x32xi1> to vector<32x32xi1>
    %21 = arith.xori %17, %20 : vector<32x32xi1>
    %22 = arith.andi %21, %15 : vector<32x32xi1>
    %23 = vector.broadcast %11 : i32 to vector<32x32xi32>
    %24 = arith.addi %13, %23 : vector<32x32xi32>
    %25 = arith.select %22, %24, %13 : vector<32x32xi1>, vector<32x32xi32>
    %c0_i32_13 = arith.constant 0 : i32
    %26 = vector.broadcast %c0_i32_13 : i32 to vector<32x32xi32>
    %27 = arith.cmpi eq, %25, %26 : vector<32x32xi32>
    %cst_14 = arith.constant 0.000000e+00 : f32
    %28 = vector.broadcast %cst_14 : f32 to vector<32x32xf32>
    %29 = arith.select %27, %28, %8 : vector<32x32xi1>, vector<32x32xf32>
    %cst_15 = arith.constant dense<0.000000e+00> : vector<32x32xf32>
    %30 = tpu.matmul %5, %29, %cst_15 {dimension_numbers = #tpu.dot_dimension_numbers<[1], [0], [0], [1], [0, 0, 1, 1], [], []>} : vector<32x32xf32>, vector<32x32xf32>, vector<32x32xf32> -> vector<32x32xf32>
    %31 = vector.broadcast %7 : vector<1x32xf32> to vector<32x32xf32>
    %32 = arith.addf %30, %31 : vector<32x32xf32>
    %cst_16 = arith.constant 0.000000e+00 : f32
    %33 = vector.broadcast %cst_16 : f32 to vector<32x32xf32>
    %34 = arith.cmpf ogt, %32, %33 : vector<32x32xf32>
    %35 = vector.broadcast %0 : f32 to vector<32x32xf32>
    %36 = arith.mulf %35, %32 : vector<32x32xf32>
    %37 = arith.select %34, %32, %36 : vector<32x32xi1>, vector<32x32xf32>
    %c0_17 = arith.constant 0 : index
    %c0_18 = arith.constant 0 : index
    %38 = vector.load %arg3[%c0_17, %c0_18] : memref<8x32xf32, #tpu.memory_space<vmem>>, vector<8x32xf32>
    %cst_19 = arith.constant dense<0.000000e+00> : vector<8x32xf32>
    %39 = tpu.matmul %38, %37, %cst_19 {dimension_numbers = #tpu.dot_dimension_numbers<[1], [0], [0], [1], [0, 0, 1, 1], [], []>} : vector<8x32xf32>, vector<32x32xf32>, vector<8x32xf32> -> vector<8x32xf32>
    %40 = arith.mulf %39, %39 : vector<8x32xf32>
    %cst_20 = arith.constant dense<0.000000e+00> : vector<8xf32>
    %41 = vector.multi_reduction <add>, %40, %cst_20 [1] : vector<8x32xf32> to vector<8xf32>
    %42 = vector.shape_cast %41 : vector<8xf32> to vector<8x1xf32>
    %cst_21 = arith.constant 1.000000e-24 : f32
    %43 = vector.broadcast %cst_21 : f32 to vector<8x1xf32>
    %44 = arith.maximumf %42, %43 : vector<8x1xf32>
    %45 = math.rsqrt %44 : vector<8x1xf32>
    %46 = vector.broadcast %45 : vector<8x1xf32> to vector<8x32xf32>
    %47 = arith.mulf %39, %46 : vector<8x32xf32>
    %c0_22 = arith.constant 0 : index
    %c0_23 = arith.constant 0 : index
    %48 = vector.load %arg4[%c0_22, %c0_23] : memref<8x32xf32, #tpu.memory_space<vmem>>, vector<8x32xf32>
    %49 = arith.mulf %47, %48 : vector<8x32xf32>
    %cst_24 = arith.constant dense<0.000000e+00> : vector<8xf32>
    %50 = vector.multi_reduction <add>, %49, %cst_24 [1] : vector<8x32xf32> to vector<8xf32>
    %51 = vector.shape_cast %50 : vector<8xf32> to vector<8x1xf32>
    %52 = vector.broadcast %1 : f32 to vector<8x1xf32>
    %53 = arith.addf %51, %52 : vector<8x1xf32>
    %54 = vector.shape_cast %53 : vector<8x1xf32> to vector<8x1xf32>
    %55 = vector.broadcast %54 : vector<8x1xf32> to vector<8x128xf32>
    %c0_25 = arith.constant 0 : index
    %c0_26 = arith.constant 0 : index
    %c0_27 = arith.constant 0 : index
    %56 = vector.load %arg8[%c0_25, %c0_26, %c0_27] : memref<1x8x128xf32, #tpu.memory_space<vmem>>, vector<1x8x128xf32>
    %57 = vector.shape_cast %56 : vector<1x8x128xf32> to vector<8x128xf32>
    %58 = vector.shape_cast %55 : vector<8x128xf32> to vector<1x8x128xf32>
    tpu.vector_store %arg8[%c0_25, %c0_26, %c0_27], %58 {strides = array<i32>} : memref<1x8x128xf32, #tpu.memory_space<vmem>>, vector<1x8x128xf32>,
    return
  }
  func.func @transform_0(%arg0: i32) -> (i32, i32, i32) {
    %c0_i32 = arith.constant 0 : i32
    %c0_i32_0 = arith.constant 0 : i32
    %c0_i32_1 = arith.constant 0 : i32
    return %arg0, %c0_i32, %c0_i32_0 : i32, i32, i32
  }
  func.func @transform_1(%arg0: i32) -> (i32, i32, i32) {
    %c0_i32 = arith.constant 0 : i32
    %c0_i32_0 = arith.constant 0 : i32
    %c0_i32_1 = arith.constant 0 : i32
    return %arg0, %c0_i32, %c0_i32_0 : i32, i32, i32
  }
  func.func @transform_2(%arg0: i32) -> (i32, i32) {
    %c0_i32 = arith.constant 0 : i32
    %c0_i32_0 = arith.constant 0 : i32
    %c0_i32_1 = arith.constant 0 : i32
    return %c0_i32, %c0_i32_0 : i32, i32
  }
  func.func @transform_3(%arg0: i32) -> (i32, i32) {
    %c0_i32 = arith.constant 0 : i32
    %c0_i32_0 = arith.constant 0 : i32
    %c0_i32_1 = arith.constant 0 : i32
    return %c0_i32, %c0_i32_0 : i32, i32
  }
  func.func @transform_4(%arg0: i32) -> (i32, i32) {
    %c0_i32 = arith.constant 0 : i32
    %c0_i32_0 = arith.constant 0 : i32
    %c0_i32_1 = arith.constant 0 : i32
    return %c0_i32, %c0_i32_0 : i32, i32
  }
  func.func @transform_5(%arg0: i32) -> (i32, i32) {
    %c0_i32 = arith.constant 0 : i32
    %c0_i32_0 = arith.constant 0 : i32
    %c0_i32_1 = arith.constant 0 : i32
    return %c0_i32, %c0_i32_0 : i32, i32
  }
  func.func @transform_6(%arg0: i32) -> i32 {
    %c0_i32 = arith.constant 0 : i32
    %c0_i32_0 = arith.constant 0 : i32
    return %c0_i32 : i32
  }
  func.func @transform_7(%arg0: i32) -> (i32, i32, i32) {
    %c0_i32 = arith.constant 0 : i32
    %c0_i32_0 = arith.constant 0 : i32
    %c0_i32_1 = arith.constant 0 : i32
    return %arg0, %c0_i32, %c0_i32_0 : i32, i32, i32
  }
}

</mosaic_0001>

<llo_original>
// kernel: cola_forward.3
$region0: #{cola_forward.3}
  #allocation0 [shape = 'u32[]', space=smem, size = 0x4, offset = 0x4, fixed_abs, tag = 'smem constant byte address 0x4 - core index']
  #allocation1 [shape = 'u32[144,128]{1,0:T(1,128)}', space=vmem, size = 0x12000, scoped, tag = 'internal scratch']
  %s0 = inlined_call_operand.vmem [shape: f32[2,32,32], index: 0, kind: input, shape index: {}]
  %s1 = inlined_call_operand.vmem [shape: f32[2,32,32], index: 1, kind: input, shape index: {}]
  %s2 = inlined_call_operand.vmem [shape: f32[8,32], index: 2, kind: input, shape index: {}]
  %s3 = inlined_call_operand.vmem [shape: f32[8,32], index: 3, kind: input, shape index: {}]
  %s4 = inlined_call_operand.vmem [shape: f32[32,32], index: 4, kind: input, shape index: {}]
  %s5 = inlined_call_operand.vmem [shape: f32[1,32], index: 5, kind: input, shape index: {}]
  %s6 = inlined_call_operand.vmem [shape: f32[2], index: 6, kind: input, shape index: {}]
  %s7 = inlined_call_operand.vmem [shape: f32[2,8,128], index: 7, kind: output, shape index: {}]
  %s8 = sld [smem:[#allocation0]]
  $region65: #{cola_forward.3} parent=0
    _
  %s10 = ssub.s32 1, %s8
  %s11 = scalar_select 0, %s10, %s8
  $region1: #{cola_forward.3} parent=0
    #allocation2 [shape = 'u8[512]{0}', space=smem, size = 0x200, scoped, tag = 'input window, operand 6, single buffered']
    #allocation3 [shape = 's32[2]{0}', space=sflag, size = 0x8, scoped, tag = 'scoped memory for cola_forward.3']
    %12 = vsyncpa [#allocation3], 0
    loop: start=0, step=1, limit=4
    $region2: #{cola_forward.3} parent=1 // loop_pre_header
      _
    $region3: #{cola_forward.3} parent=1 // loop_header
      %s14 = sphi 0, %s18
      %p15 = scmp.ge.s32.totalorder %s14, 4
      %s24 = sphi 0, %s26
      %s27 = sphi 0, %s24
      %s28 = sphi 0, %s27
      %s44 = sphi 0, %s28
      %s50 = sphi 0, %s52
      %s53 = sphi 0, %s50
      %s54 = sphi 0, %s53
      %s70 = sphi 0, %s54
      %s74 = sphi 0, %s74
      %s76 = sphi 0, %s74
      %s77 = sphi 0, %s76
      %s91 = sphi 0, %s77
      %s95 = sphi 0, %s95
      %s97 = sphi 0, %s95
      %s98 = sphi 0, %s97
      %s112 = sphi 0, %s98
      %s116 = sphi 0, %s116
      %s118 = sphi 0, %s116
      %s119 = sphi 0, %s118
      %s133 = sphi 0, %s119
      %s137 = sphi 0, %s137
      %s139 = sphi 0, %s137
      %s140 = sphi 0, %s139
      %s154 = sphi 0, %s140
      %s158 = sphi 0, %s158
      %s160 = sphi 0, %s158
      %s161 = sphi 0, %s160
      %s175 = sphi 0, %s161
      %s181 = sphi 0, %s183
      %s184 = sphi 0, %s181
      %s185 = sphi 0, %s184
      %s201 = sphi 0, %s185
    $region4: #{cola_forward.3} parent=1 // loop_header_branch
      %17 = sbr.rel (%p15) target = $region8
    $region5: #{cola_forward.3} parent=1 // loop_body
      %s19 = ssub.s32 %s14, 1
      %s20 = ssub.s32 %s14, 2
      %s21 = sadd.s32 %s14, 1
      %s22 = ssub.s32 %s14, %s21
      %p23 = scmp.eq.s32.totalorder %s22, 0
      %s25 = sadd.s32 %s24, 1
      %s26 = scalar_select %p23, %s24, %s25
      %p29 = pneg %p23
      %p30 = scmp.eq.s32.totalorder %s14, 1
      %p31 = por %p29, %p30
      %p32 = scmp.ne.s32.totalorder %s24, %s27
      %p33 = scmp.eq.s32.totalorder %s14, 0
      %p34 = por %p32, %p33
      %p35 = scmp.ne.s32.totalorder %s24, %s27
      %p36 = scmp.eq.s32.totalorder %s19, 1
      %p37 = por %p35, %p36
      %p38 = scmp.ne.s32.totalorder %s27, %s28
      %p39 = scmp.eq.s32.totalorder %s19, 0
      %p40 = por %p38, %p39
      %p41 = scmp.ne.s32.totalorder %s27, %s28
      %p42 = scmp.eq.s32.totalorder %s20, 1
      %p43 = por %p41, %p42
      %p45 = scmp.ne.s32.totalorder %s28, %s44
      %p46 = scmp.eq.s32.totalorder %s20, 0
      %p47 = por %p45, %p46
      %s48 = ssub.s32 %s14, %s21
      %p49 = scmp.eq.s32.totalorder %s48, 0
      %s51 = sadd.s32 %s50, 1
      %s52 = scalar_select %p49, %s50, %s51
      %p55 = pneg %p49
      %p56 = scmp.eq.s32.totalorder %s14, 1
      %p57 = por %p55, %p56
      %p58 = scmp.ne.s32.totalorder %s50, %s53
      %p59 = scmp.eq.s32.totalorder %s14, 0
      %p60 = por %p58, %p59
      %p61 = scmp.ne.s32.totalorder %s50, %s53
      %p62 = scmp.eq.s32.totalorder %s19, 1
      %p63 = por %p61, %p62
      %p64 = scmp.ne.s32.totalorder %s53, %s54
      %p65 = scmp.eq.s32.totalorder %s19, 0
      %p66 = por %p64, %p65
      %p67 = scmp.ne.s32.totalorder %s53, %s54
      %p68 = scmp.eq.s32.totalorder %s20, 1
      %p69 = por %p67, %p68
      %p71 = scmp.ne.s32.totalorder %s54, %s70
      %p72 = scmp.eq.s32.totalorder %s20, 0
      %p73 = por %p71, %p72
      %s75 = sadd.s32 %s74, 1
      %p78 = scmp.eq.s32.totalorder %s14, 1
      %p79 = scmp.ne.s32.totalorder %s74, %s76
      %p80 = scmp.eq.s32.totalorder %s14, 0
      %p81 = por %p79, %p80
      %p82 = scmp.ne.s32.totalorder %s74, %s76
      %p83 = scmp.eq.s32.totalorder %s19, 1
      %p84 = por %p82, %p83
      %p85 = scmp.ne.s32.totalorder %s76, %s77
      %p86 = scmp.eq.s32.totalorder %s19, 0
      %p87 = por %p85, %p86
      %p88 = scmp.ne.s32.totalorder %s76, %s77
      %p89 = scmp.eq.s32.totalorder %s20, 1
      %p90 = por %p88, %p89
      %p92 = scmp.ne.s32.totalorder %s77, %s91
      %p93 = scmp.eq.s32.totalorder %s20, 0
      %p94 = por %p92, %p93
      %s96 = sadd.s32 %s95, 1
      %p99 = scmp.eq.s32.totalorder %s14, 1
      %p100 = scmp.ne.s32.totalorder %s95, %s97
      %p101 = scmp.eq.s32.totalorder %s14, 0
      %p102 = por %p100, %p101
      %p103 = scmp.ne.s32.totalorder %s95, %s97
      %p104 = scmp.eq.s32.totalorder %s19, 1
      %p105 = por %p103, %p104
      %p106 = scmp.ne.s32.totalorder %s97, %s98
      %p107 = scmp.eq.s32.totalorder %s19, 0
      %p108 = por %p106, %p107
      %p109 = scmp.ne.s32.totalorder %s97, %s98
      %p110 = scmp.eq.s32.totalorder %s20, 1
      %p111 = por %p109, %p110
      %p113 = scmp.ne.s32.totalorder %s98, %s112
      %p114 = scmp.eq.s32.totalorder %s20, 0
      %p115 = por %p113, %p114
      %s117 = sadd.s32 %s116, 1
      %p120 = scmp.eq.s32.totalorder %s14, 1
      %p121 = scmp.ne.s32.totalorder %s116, %s118
      %p122 = scmp.eq.s32.totalorder %s14, 0
      %p123 = por %p121, %p122
      %p124 = scmp.ne.s32.totalorder %s116, %s118
      %p125 = scmp.eq.s32.totalorder %s19, 1
      %p126 = por %p124, %p125
      %p127 = scmp.ne.s32.totalorder %s118, %s119
      %p128 = scmp.eq.s32.totalorder %s19, 0
      %p129 = por %p127, %p128
      %p130 = scmp.ne.s32.totalorder %s118, %s119
      %p131 = scmp.eq.s32.totalorder %s20, 1
      %p132 = por %p130, %p131
      %p134 = scmp.ne.s32.totalorder %s119, %s133
      %p135 = scmp.eq.s32.totalorder %s20, 0
      %p136 = por %p134, %p135
      %s138 = sadd.s32 %s137, 1
      %p141 = scmp.eq.s32.totalorder %s14, 1
      %p142 = scmp.ne.s32.totalorder %s137, %s139
      %p143 = scmp.eq.s32.totalorder %s14, 0
      %p144 = por %p142, %p143
      %p145 = scmp.ne.s32.totalorder %s137, %s139
      %p146 = scmp.eq.s32.totalorder %s19, 1
      %p147 = por %p145, %p146
      %p148 = scmp.ne.s32.totalorder %s139, %s140
      %p149 = scmp.eq.s32.totalorder %s19, 0
      %p150 = por %p148, %p149
      %p151 = scmp.ne.s32.totalorder %s139, %s140
      %p152 = scmp.eq.s32.totalorder %s20, 1
      %p153 = por %p151, %p152
      %p155 = scmp.ne.s32.totalorder %s140, %s154
      %p156 = scmp.eq.s32.totalorder %s20, 0
      %p157 = por %p155, %p156
      %s159 = sadd.s32 %s158, 1
      %p162 = scmp.eq.s32.totalorder %s14, 1
      %p163 = scmp.ne.s32.totalorder %s158, %s160
      %p164 = scmp.eq.s32.totalorder %s14, 0
      %p165 = por %p163, %p164
      %p166 = scmp.ne.s32.totalorder %s158, %s160
      %p167 = scmp.eq.s32.totalorder %s19, 1
      %p168 = por %p166, %p167
      %p169 = scmp.ne.s32.totalorder %s160, %s161
      %p170 = scmp.eq.s32.totalorder %s19, 0
      %p171 = por %p169, %p170
      %p172 = scmp.ne.s32.totalorder %s160, %s161
      %p173 = scmp.eq.s32.totalorder %s20, 1
      %p174 = por %p172, %p173
      %p176 = scmp.ne.s32.totalorder %s161, %s175
      %p177 = scmp.eq.s32.totalorder %s20, 0
      %p178 = por %p176, %p177
      %s179 = ssub.s32 %s14, %s21
      %p180 = scmp.eq.s32.totalorder %s179, 0
      %s182 = sadd.s32 %s181, 1
      %s183 = scalar_select %p180, %s181, %s182
      %p186 = pneg %p180
      %p187 = scmp.eq.s32.totalorder %s14, 1
      %p188 = por %p186, %p187
      %p189 = scmp.ne.s32.totalorder %s181, %s184
      %p190 = scmp.eq.s32.totalorder %s14, 0
      %p191 = por %p189, %p190
      %p192 = scmp.ne.s32.totalorder %s181, %s184
      %p193 = scmp.eq.s32.totalorder %s19, 1
      %p194 = por %p192, %p193
      %p195 = scmp.ne.s32.totalorder %s184, %s185
      %p196 = scmp.eq.s32.totalorder %s19, 0
      %p197 = por %p195, %p196
      %p198 = scmp.ne.s32.totalorder %s184, %s185
      %p199 = scmp.eq.s32.totalorder %s20, 1
      %p200 = por %p198, %p199
      %p202 = scmp.ne.s32.totalorder %s185, %s201
      %p203 = scmp.eq.s32.totalorder %s20, 0
      %p204 = por %p202, %p203
      %p205 = scmp.le.s32.totalorder 1, %s14
      %p206 = scmp.lt.s32.totalorder %s14, 3
      %p207 = pnand %p205, %p206
      %p208 = pneg %p207
      // Predicated region
      $region9: #{cola_forward.3} parent=5 // pred_check
        _
      $region10: #{cola_forward.3} parent=5 // pred_check_branch
        %210 = sbr.rel (%p207) target = $region12
      $region11: #{cola_forward.3} parent=5 // pred_region
        %s211 = ssub.s32 %s14, 1
        // Predicated region
        $region13: #{cola_forward.3} parent=11 // pred_check
          %p212 = pneg %p87
        $region14: #{cola_forward.3} parent=11 // pred_check_branch
          %214 = sbr.rel (%p212) target = $region16
        $region15: #{cola_forward.3} parent=11 // pred_region
          _
        $region16: #{cola_forward.3} parent=11 // pred_fallthru
          _
        // Predicated region
        $region17: #{cola_forward.3} parent=11 // pred_check
          %p215 = pneg %p108
        $region18: #{cola_forward.3} parent=11 // pred_check_branch
          %217 = sbr.rel (%p215) target = $region20
        $region19: #{cola_forward.3} parent=11 // pred_region
          _
        $region20: #{cola_forward.3} parent=11 // pred_fallthru
          _
        // Predicated region
        $region21: #{cola_forward.3} parent=11 // pred_check
          %p218 = pneg %p129
        $region22: #{cola_forward.3} parent=11 // pred_check_branch
          %220 = sbr.rel (%p218) target = $region24
        $region23: #{cola_forward.3} parent=11 // pred_region
          _
        $region24: #{cola_forward.3} parent=11 // pred_fallthru
          _
        // Predicated region
        $region25: #{cola_forward.3} parent=11 // pred_check
          %p221 = pneg %p150
        $region26: #{cola_forward.3} parent=11 // pred_check_branch
          %223 = sbr.rel (%p221) target = $region28
        $region27: #{cola_forward.3} parent=11 // pred_region
          _
        $region28: #{cola_forward.3} parent=11 // pred_fallthru
          _
        // Predicated region
        $region29: #{cola_forward.3} parent=11 // pred_check
          %p224 = pneg %p171
        $region30: #{cola_forward.3} parent=11 // pred_check_branch
          %226 = sbr.rel (%p224) target = $region32
        $region31: #{cola_forward.3} parent=11 // pred_region
          %s228 = ssub.s32 16, 16
          %229 = vsyncadd [#allocation3], %s228
          %s231 = sshll.u32 %s6, 4
          %s232 = int_to_ptr.vmem [resolvable:$true] %s231
          %234 = dma.vmem_to_smem %s232, 16, [#allocation2], [#allocation3]
        $region32: #{cola_forward.3} parent=11 // pred_fallthru
          _
      $region12: #{cola_forward.3} parent=5 // pred_fallthru
        _
      %p235 = scmp.lt.s32.totalorder %s14, 2
      // Predicated region
      $region33: #{cola_forward.3} parent=5 // pred_check
        %p236 = pneg %p235
      $region34: #{cola_forward.3} parent=5 // pred_check_branch
        %238 = sbr.rel (%p236) target = $region36
      $region35: #{cola_forward.3} parent=5 // pred_region
        // Predicated region
        $region37: #{cola_forward.3} parent=35 // pred_check
          %p239 = pneg %p34
        $region38: #{cola_forward.3} parent=35 // pred_check_branch
          %241 = sbr.rel (%p239) target = $region40
        $region39: #{cola_forward.3} parent=35 // pred_region
          %p242 = scmp.lt.s32.totalorder %s14, 1
          %s243 = scalar_select %p242, %s14, 1
          %s244 = smul.addr %s243, 4
          %s245 = smul.addr %s244, 8
          %s246 = scalar_lea.vmem %s0, %s245
        $region40: #{cola_forward.3} parent=35 // pred_fallthru
          _
        // Predicated region
        $region41: #{cola_forward.3} parent=35 // pred_check
          %p247 = pneg %p60
        $region42: #{cola_forward.3} parent=35 // pred_check_branch
          %249 = sbr.rel (%p247) target = $region44
        $region43: #{cola_forward.3} parent=35 // pred_region
          %p250 = scmp.lt.s32.totalorder %s14, 1
          %s251 = scalar_select %p250, %s14, 1
          %s252 = smul.addr %s251, 4
          %s253 = smul.addr %s252, 8
          %s254 = scalar_lea.vmem %s1, %s253
        $region44: #{cola_forward.3} parent=35 // pred_fallthru
          _
      $region36: #{cola_forward.3} parent=5 // pred_fallthru
        _
      %p255 = scmp.le.s32.totalorder 1, %s14
      %p256 = scmp.lt.s32.totalorder %s14, 3
      %p257 = pnand %p255, %p256
      %p258 = pneg %p257
      // Predicated region
      $region45: #{cola_forward.3} parent=5 // pred_check
        _
      $region46: #{cola_forward.3} parent=5 // pred_check_branch
        %260 = sbr.rel (%p257) target = $region48
      $region47: #{cola_forward.3} parent=5 // pred_region
        %s261 = ssub.s32 %s14, 1
        // Predicated region
        $region49: #{cola_forward.3} parent=47 // pred_check
          %p262 = pneg %p171
        $region50: #{cola_forward.3} parent=47 // pred_check_branch
          %264 = sbr.rel (%p262) target = $region52
        $region51: #{cola_forward.3} parent=47 // pred_region
          %265 = dma.done [#allocation3], 16
        $region52: #{cola_forward.3} parent=47 // pred_fallthru
          _
        %266 = sfence
        %p267 = scmp.lt.s32.totalorder %s19, 1
        %s268 = scalar_select %p267, %s19, 1
        %s269 = smul.addr %s268, 4
        %s270 = smul.addr %s269, 8
        %s271 = scalar_lea.vmem %s0, %s270
        %p272 = pneg %p40
        %p273 = pneg %p37
        %p274 = scmp.lt.s32.totalorder %s19, 1
        %s275 = scalar_select %p274, %s19, 1
        %s276 = smul.addr %s275, 4
        %s277 = smul.addr %s276, 8
        %s278 = scalar_lea.vmem %s1, %s277
        %p279 = pneg %p66
        %p280 = pneg %p63
        %p281 = pneg %p87
        %p282 = pneg %p84
        %p283 = pneg %p108
        %p284 = pneg %p105
        %p285 = pneg %p129
        %p286 = pneg %p126
        %p287 = pneg %p150
        %p288 = pneg %p147
        %p289 = pneg %p171
        %p290 = pneg %p168
        %p291 = pneg %p197
        %p292 = pneg %p194
        %p293 = scmp.lt.s32.totalorder %s19, 1
        %s294 = scalar_select %p293, %s19, 1
        %s295 = smul.addr %s294, 8
        %s296 = scalar_lea.vmem %s7, %s295
        %p297 = scmp.lt.s32.totalorder %s19, 1
        %s298 = scalar_select %p297, %s19, 1
        %s299 = smul.addr %s298, 4
        %s300 = smul.addr %s299, 8
        %s301 = scalar_lea.vmem %s0, %s300
        %p302 = scmp.lt.s32.totalorder %s19, 1
        %s303 = scalar_select %p302, %s19, 1
        %s304 = smul.addr %s303, 4
        %s305 = smul.addr %s304, 8
        %s306 = scalar_lea.vmem %s1, %s305
        %p307 = scmp.lt.s32.totalorder %s19, 1
        %s308 = scalar_select %p307, %s19, 1
        %s309 = smul.addr %s308, 8
        %s310 = scalar_lea.vmem %s7, %s309
        %s311 = sld [smem:[#allocation2]]
        %s312 = sld [smem:[#allocation2 + $0x1]]
        %v313 = vld [vmem:[%s301] sm:$0xff]
        %v314 = vld [vmem:[%s301 + $0x8] sm:$0xff]
        %v315 = vld [vmem:[%s301 + $0x10] sm:$0xff]
        %v316 = vld [vmem:[%s301 + $0x18] sm:$0xff]
        %v317 = vld [vmem:[%s306] sm:$0xff]
        %v318 = vld [vmem:[%s306 + $0x8] sm:$0xff]
        %v319 = vld [vmem:[%s306 + $0x10] sm:$0xff]
        %v320 = vld [vmem:[%s306 + $0x18] sm:$0xff]
        %v321 = vld [vmem:[%s4] sm:$0xff]
        %v322 = vld [vmem:[%s4 + $0x8] sm:$0xff]
        %v323 = vld [vmem:[%s4 + $0x10] sm:$0xff]
        %v324 = vld [vmem:[%s4 + $0x18] sm:$0xff]
        %v325 = vld [vmem:[%s5] sm:$0x1]
        %vm326 = vcmask 261120
        %v328 = vsel %vm326, %v313, 0
        %v331 = vsel %vm326, %v314, 0
        %v334 = vsel %vm326, %v315, 0
        %v337 = vsel %vm326, %v316, 0
        %339 = vmatprep.subr.mxu0 0.0
        %340 = vmatpush1.msra.mxu0 %v321
        %341 = vmatprep.subr.mxu0 0.0
        %342 = vmatpush1.msra.mxu0 %v322
        %343 = vmatprep.subr.mxu0 0.0
        %344 = vmatpush1.msra.mxu0 %v323
        %345 = vmatprep.subr.mxu0 0.0
        %346 = vmatpush1.msra.mxu0 %v324
        %347 = vmatprep.subr.mxu0 0.0
        %348 = vmatpush1.msra.mxu0 0.0
        %349 = vmatprep.subr.mxu0 0.0
        %350 = vmatpush1.msra.mxu0 0.0
        %351 = vmatprep.subr.mxu0 0.0
        %352 = vmatpush1.msra.mxu0 0.0
        %353 = vmatprep.subr.mxu0 0.0
        %354 = vmatpush1.msra.mxu0 0.0
        %355 = vmatprep.subr.mxu0 0.0
        %356 = vmatpush1.msra.mxu0 0.0
        %357 = vmatprep.subr.mxu0 0.0
        %358 = vmatpush1.msra.mxu0 0.0
        %359 = vmatprep.subr.mxu0 0.0
        %360 = vmatpush1.msra.mxu0 0.0
        %361 = vmatprep.subr.mxu0 0.0
        %362 = vmatpush1.msra.mxu0 0.0
        %363 = vmatprep.subr.mxu0 0.0
        %364 = vmatpush1.msra.mxu0 0.0
        %365 = vmatprep.subr.mxu0 0.0
        %366 = vmatpush1.msra.mxu0 0.0
        %367 = vmatprep.subr.mxu0 0.0
        %368 = vmatpush1.msra.mxu0 0.0
        %369 = vmatprep.subr.mxu0 0.0
        %370 = vmatpush1.msra.mxu0 0.0
        %371 = vmatprep.subr.mxu0 0.0
        %372 = vmatpush1.msra.mxu0 0.0
        %373 = vmatprep.subr.mxu0 0.0
        %374 = vmatpush1.msra.mxu0 0.0
        %375 = vmatprep.subr.mxu0 0.0
        %376 = vmatpush1.msra.mxu0 0.0
        %377 = vmatprep.subr.mxu0 0.0
        %378 = vmatpush1.msra.mxu0 0.0
        %379 = vmatprep.subr.mxu0 0.0
        %380 = vmatpush1.msra.mxu0 0.0
        %381 = vmatprep.subr.mxu0 0.0
        %382 = vmatpush1.msra.mxu0 0.0
        %383 = vmatprep.subr.mxu0 0.0
        %384 = vmatpush1.msra.mxu0 0.0
        %385 = vmatprep.subr.mxu0 0.0
        %386 = vmatpush1.msra.mxu0 0.0
        %387 = vmatprep.subr.mxu0 0.0
        %388 = vmatpush1.msra.mxu0 0.0
        %389 = vmatprep.subr.mxu0 0.0
        %390 = vmatpush1.msra.mxu0 0.0
        %391 = vmatprep.subr.mxu0 0.0
        %392 = vmatpush1.msra.mxu0 0.0
        %393 = vmatprep.subr.mxu0 0.0
        %394 = vmatpush1.msra.mxu0 0.0
        %395 = vmatprep.subr.mxu0 0.0
        %396 = vmatpush1.msra.mxu0 0.0
        %397 = vmatprep.subr.mxu0 0.0
        %398 = vmatpush1.msra.mxu0 0.0
        %399 = vmatprep.subr.mxu0 0.0
        %400 = vmatpush1.msra.mxu0 0.0
        %401 = vmatprep.subr.mxu0 0.0
        %402 = vmatpush1.msra.mxu0 0.0
        %403 = vmatprep.mubr.f32.mxu0 0.0
        %404 = vmatmul.mubr.f32.gmra.mrb[0].mxu0 %v328
        %v405 = vpop.f32.mrb[0].mxu0
        %v406 = vadd.f32 0.0, %v405
        %v407 = vpop.f32.mrb[0].mxu0
        %408 = vmatprep.mubr.f32.mxu0 0.0
        %409 = vmatmul.mubr.f32.gmra.mrb[0].mxu0 %v331
        %v410 = vpop.f32.mrb[0].mxu0
        %v411 = vadd.f32 0.0, %v410
        %v412 = vpop.f32.mrb[0].mxu0
        %413 = vmatprep.mubr.f32.mxu0 0.0
        %414 = vmatmul.mubr.f32.gmra.mrb[0].mxu0 %v334
        %v415 = vpop.f32.mrb[0].mxu0
        %v416 = vadd.f32 0.0, %v415
        %v417 = vpop.f32.mrb[0].mxu0
        %418 = vmatprep.mubr.f32.mxu0 0.0
        %419 = vmatmul.mubr.f32.gmra.mrb[0].mxu0 %v337
        %v420 = vpop.f32.mrb[0].mxu0
        %v421 = vadd.f32 0.0, %v420
        %v422 = vpop.f32.mrb[0].mxu0
        %423 = vdwg.mxu0
        %v424 = vlaneseq
        %v425 = vshrl.u32 %v424, 7
        %v426 = vadd.s32 %v425, 8
        %v427 = vadd.s32 %v425, 16
        %v428 = vadd.s32 %v425, 24
        %vm429 = vcmp.lt.s32.totalorder %v425, 0
        %v430 = vsub.s32 0, %v425
        %v431 = vsel %vm429, %v430, %v425
        %v432 = vshrl.u32 %v431, 2
        %v433 = vand.u32 %v431, 3
        %v434 = vsub.s32 0, %v433
        %v435 = vsel %vm429, %v434, %v433
        %vm436 = vcmp.lt.s32.totalorder %v426, 0
        %v437 = vsub.s32 0, %v426
        %v438 = vsel %vm436, %v437, %v426
        %v439 = vshrl.u32 %v438, 2
        %v440 = vand.u32 %v438, 3
        %v441 = vsub.s32 0, %v440
        %v442 = vsel %vm436, %v441, %v440
        %vm443 = vcmp.lt.s32.totalorder %v427, 0
        %v444 = vsub.s32 0, %v427
        %v445 = vsel %vm443, %v444, %v427
        %v446 = vshrl.u32 %v445, 2
        %v447 = vand.u32 %v445, 3
        %v448 = vsub.s32 0, %v447
        %v449 = vsel %vm443, %v448, %v447
        %vm450 = vcmp.lt.s32.totalorder %v428, 0
        %v451 = vsub.s32 0, %v428
        %v452 = vsel %vm450, %v451, %v428
        %v453 = vshrl.u32 %v452, 2
        %v454 = vand.u32 %v452, 3
        %v455 = vsub.s32 0, %v454
        %v456 = vsel %vm450, %v455, %v454
        %vm457 = vcmp.ne.s32.totalorder %v435, 0
        %vm458 = vcmp.ne.s32.totalorder %v442, 0
        %vm459 = vcmp.ne.s32.totalorder %v449, 0
        %vm460 = vcmp.ne.s32.totalorder %v456, 0
        %vm461 = vcmp.lt.s32.totalorder %v435, 0
        %vm462 = vcmp.lt.s32.totalorder %v442, 0
        %vm463 = vcmp.lt.s32.totalorder %v449, 0
        %vm464 = vcmp.lt.s32.totalorder %v456, 0
        %vm465 = vmand %vm461, %vm457
        %vm466 = vmand %vm462, %vm458
        %vm467 = vmand %vm463, %vm459
        %vm468 = vmand %vm464, %vm460
        %v469 = vadd.s32 %v435, 4
        %v470 = vadd.s32 %v442, 4
        %v471 = vadd.s32 %v449, 4
        %v472 = vadd.s32 %v456, 4
        %v473 = vsel %vm465, %v469, %v435
        %v474 = vsel %vm466, %v470, %v442
        %v475 = vsel %vm467, %v471, %v449
        %v476 = vsel %vm468, %v472, %v456
        %vm477 = vcmp.eq.s32.totalorder %v473, 0
        %vm478 = vcmp.eq.s32.totalorder %v474, 0
        %vm479 = vcmp.eq.s32.totalorder %v475, 0
        %vm480 = vcmp.eq.s32.totalorder %v476, 0
        %v481 = vsel %vm477, 0.0, %v406
        %v482 = vsel %vm478, 0.0, %v411
        %v483 = vsel %vm479, 0.0, %v416
        %v484 = vsel %vm480, 0.0, %v421
        %v486 = vlaneseq
        %v487 = vshrl.u32 %v486, 7
        %v488 = vsub.s32 0, %v487
        %v489 = vrot.slane %v325, %v488
        %v492 = vsel %vm326, %v317, 0
        %v495 = vsel %vm326, %v318, 0
        %v498 = vsel %vm326, %v319, 0
        %v501 = vsel %vm326, %v320, 0
        %503 = vmatprep.subr.mxu0 0.0
        %504 = vmatpush1.msra.mxu0 %v481
        %505 = vmatprep.subr.mxu0 0.0
        %506 = vmatpush1.msra.mxu0 %v482
        %507 = vmatprep.subr.mxu0 0.0
        %508 = vmatpush1.msra.mxu0 %v483
        %509 = vmatprep.subr.mxu0 0.0
        %510 = vmatpush1.msra.mxu0 %v484
        %511 = vmatprep.subr.mxu0 0.0
        %512 = vmatpush1.msra.mxu0 0.0
        %513 = vmatprep.subr.mxu0 0.0
        %514 = vmatpush1.msra.mxu0 0.0
        %515 = vmatprep.subr.mxu0 0.0
        %516 = vmatpush1.msra.mxu0 0.0
        %517 = vmatprep.subr.mxu0 0.0
        %518 = vmatpush1.msra.mxu0 0.0
        %519 = vmatprep.subr.mxu0 0.0
        %520 = vmatpush1.msra.mxu0 0.0
        %521 = vmatprep.subr.mxu0 0.0
        %522 = vmatpush1.msra.mxu0 0.0
        %523 = vmatprep.subr.mxu0 0.0
        %524 = vmatpush1.msra.mxu0 0.0
        %525 = vmatprep.subr.mxu0 0.0
        %526 = vmatpush1.msra.mxu0 0.0
        %527 = vmatprep.subr.mxu0 0.0
        %528 = vmatpush1.msra.mxu0 0.0
        %529 = vmatprep.subr.mxu0 0.0
        %530 = vmatpush1.msra.mxu0 0.0
        %531 = vmatprep.subr.mxu0 0.0
        %532 = vmatpush1.msra.mxu0 0.0
        %533 = vmatprep.subr.mxu0 0.0
        %534 = vmatpush1.msra.mxu0 0.0
        %535 = vmatprep.subr.mxu0 0.0
        %536 = vmatpush1.msra.mxu0 0.0
        %537 = vmatprep.subr.mxu0 0.0
        %538 = vmatpush1.msra.mxu0 0.0
        %539 = vmatprep.subr.mxu0 0.0
        %540 = vmatpush1.msra.mxu0 0.0
        %541 = vmatprep.subr.mxu0 0.0
        %542 = vmatpush1.msra.mxu0 0.0
        %543 = vmatprep.subr.mxu0 0.0
        %544 = vmatpush1.msra.mxu0 0.0
        %545 = vmatprep.subr.mxu0 0.0
        %546 = vmatpush1.msra.mxu0 0.0
        %547 = vmatprep.subr.mxu0 0.0
        %548 = vmatpush1.msra.mxu0 0.0
        %549 = vmatprep.subr.mxu0 0.0
        %550 = vmatpush1.msra.mxu0 0.0
        %551 = vmatprep.subr.mxu0 0.0
        %552 = vmatpush1.msra.mxu0 0.0
        %553 = vmatprep.subr.mxu0 0.0
        %554 = vmatpush1.msra.mxu0 0.0
        %555 = vmatprep.subr.mxu0 0.0
        %556 = vmatpush1.msra.mxu0 0.0
        %557 = vmatprep.subr.mxu0 0.0
        %558 = vmatpush1.msra.mxu0 0.0
        %559 = vmatprep.subr.mxu0 0.0
        %560 = vmatpush1.msra.mxu0 0.0
        %561 = vmatprep.subr.mxu0 0.0
        %562 = vmatpush1.msra.mxu0 0.0
        %563 = vmatprep.subr.mxu0 0.0
        %564 = vmatpush1.msra.mxu0 0.0
        %565 = vmatprep.subr.mxu0 0.0
        %566 = vmatpush1.msra.mxu0 0.0
        %567 = vmatprep.mubr.f32.mxu0 0.0
        %568 = vmatmul.mubr.f32.gmra.mrb[0].mxu0 %v492
        %v569 = vpop.f32.mrb[0].mxu0
        %v570 = vadd.f32 %v489, %v569
        %v571 = vpop.f32.mrb[0].mxu0
        %572 = vmatprep.mubr.f32.mxu0 0.0
        %573 = vmatmul.mubr.f32.gmra.mrb[0].mxu0 %v495
        %v574 = vpop.f32.mrb[0].mxu0
        %v575 = vadd.f32 %v489, %v574
        %v576 = vpop.f32.mrb[0].mxu0
        %577 = vmatprep.mubr.f32.mxu0 0.0
        %578 = vmatmul.mubr.f32.gmra.mrb[0].mxu0 %v498
        %v579 = vpop.f32.mrb[0].mxu0
        %v580 = vadd.f32 %v489, %v579
        %v581 = vpop.f32.mrb[0].mxu0
        %582 = vmatprep.mubr.f32.mxu0 0.0
        %583 = vmatmul.mubr.f32.gmra.mrb[0].mxu0 %v501
        %v584 = vpop.f32.mrb[0].mxu0
        %v585 = vadd.f32 %v489, %v584
        %v586 = vpop.f32.mrb[0].mxu0
        %587 = vdwg.mxu0
        %vm588 = vcmp.gt.f32.partialorder %v570, 0.0
        %vm589 = vcmp.gt.f32.partialorder %v575, 0.0
        %vm590 = vcmp.gt.f32.partialorder %v580, 0.0
        %vm591 = vcmp.gt.f32.partialorder %v585, 0.0
        %v592 = vstv %s311
        %v593 = vmul.f32 %v592, %v570
        %v594 = vmul.f32 %v592, %v575
        %v595 = vmul.f32 %v592, %v580
        %v596 = vmul.f32 %v592, %v585
        %v597 = vsel %vm588, %v570, %v593
        %v598 = vsel %vm589, %v575, %v594
        %v599 = vsel %vm590, %v580, %v595
        %v600 = vsel %vm591, %v585, %v596
        %v601 = vld [vmem:[%s2] sm:$0xff]
        %v603 = vsel %vm326, %v601, 0
        %605 = vmatprep.subr.mxu0 0.0
        %606 = vmatpush1.msra.mxu0 %v597
        %607 = vmatprep.subr.mxu0 0.0
        %608 = vmatpush1.msra.mxu0 %v598
        %609 = vmatprep.subr.mxu0 0.0
        %610 = vmatpush1.msra.mxu0 %v599
        %611 = vmatprep.subr.mxu0 0.0
        %612 = vmatpush1.msra.mxu0 %v600
        %613 = vmatprep.subr.mxu0 0.0
        %614 = vmatpush1.msra.mxu0 0.0
        %615 = vmatprep.subr.mxu0 0.0
        %616 = vmatpush1.msra.mxu0 0.0
        %617 = vmatprep.subr.mxu0 0.0
        %618 = vmatpush1.msra.mxu0 0.0
        %619 = vmatprep.subr.mxu0 0.0
        %620 = vmatpush1.msra.mxu0 0.0
        %621 = vmatprep.subr.mxu0 0.0
        %622 = vmatpush1.msra.mxu0 0.0
        %623 = vmatprep.subr.mxu0 0.0
        %624 = vmatpush1.msra.mxu0 0.0
        %625 = vmatprep.subr.mxu0 0.0
        %626 = vmatpush1.msra.mxu0 0.0
        %627 = vmatprep.subr.mxu0 0.0
        %628 = vmatpush1.msra.mxu0 0.0
        %629 = vmatprep.subr.mxu0 0.0
        %630 = vmatpush1.msra.mxu0 0.0
        %631 = vmatprep.subr.mxu0 0.0
        %632 = vmatpush1.msra.mxu0 0.0
        %633 = vmatprep.subr.mxu0 0.0
        %634 = vmatpush1.msra.mxu0 0.0
        %635 = vmatprep.subr.mxu0 0.0
        %636 = vmatpush1.msra.mxu0 0.0
        %637 = vmatprep.subr.mxu0 0.0
        %638 = vmatpush1.msra.mxu0 0.0
        %639 = vmatprep.subr.mxu0 0.0
        %640 = vmatpush1.msra.mxu0 0.0
        %641 = vmatprep.subr.mxu0 0.0
        %642 = vmatpush1.msra.mxu0 0.0
        %643 = vmatprep.subr.mxu0 0.0
        %644 = vmatpush1.msra.mxu0 0.0
        %645 = vmatprep.subr.mxu0 0.0
        %646 = vmatpush1.msra.mxu0 0.0
        %647 = vmatprep.subr.mxu0 0.0
        %648 = vmatpush1.msra.mxu0 0.0
        %649 = vmatprep.subr.mxu0 0.0
        %650 = vmatpush1.msra.mxu0 0.0
        %651 = vmatprep.subr.mxu0 0.0
        %652 = vmatpush1.msra.mxu0 0.0
        %653 = vmatprep.subr.mxu0 0.0
        %654 = vmatpush1.msra.mxu0 0.0
        %655 = vmatprep.subr.mxu0 0.0
        %656 = vmatpush1.msra.mxu0 0.0
        %657 = vmatprep.subr.mxu0 0.0
        %658 = vmatpush1.msra.mxu0 0.0
        %659 = vmatprep.subr.mxu0 0.0
        %660 = vmatpush1.msra.mxu0 0.0
        %661 = vmatprep.subr.mxu0 0.0
        %662 = vmatpush1.msra.mxu0 0.0
        %663 = vmatprep.subr.mxu0 0.0
        %664 = vmatpush1.msra.mxu0 0.0
        %665 = vmatprep.subr.mxu0 0.0
        %666 = vmatpush1.msra.mxu0 0.0
        %667 = vmatprep.subr.mxu0 0.0
        %668 = vmatpush1.msra.mxu0 0.0
        %669 = vmatprep.mubr.f32.mxu0 0.0
        %670 = vmatmul.mubr.f32.gmra.mrb[0].mxu0 %v603
        %v671 = vpop.f32.mrb[0].mxu0
        %v672 = vadd.f32 0.0, %v671
        %v673 = vpop.f32.mrb[0].mxu0
        %674 = vdwg.mxu0
        %v675 = vmul.f32 %v672, %v672
        %v676 = vsel %vm326, %v675, 0.0
        %677 = vadd.xlane.f32.xlu0 %v676
        %v678 = vpop.xlane.xlu0 %677
        %v679 = vmax.f32 %v678, 1e-24
        %v680 = vrsqrt.pop %v679
        %v681 = vmul.f32 %v672, %v680
        %v682 = vld [vmem:[%s3] sm:$0xff]
        %v683 = vmul.f32 %v681, %v682
        %v684 = vsel %vm326, %v683, 0.0
        %685 = vadd.xlane.f32.xlu0 %v684
        %v686 = vpop.xlane.xlu0 %685
        %v687 = vstv %s312
        %v688 = vadd.f32 %v686, %v687
        %689 = vst [vmem:[%s310] sm:$0xff] %v688
        %p690 = scmp.lt.s32.totalorder %s19, 1
        %s691 = scalar_select %p690, %s19, 1
        %s692 = smul.addr %s691, 8
        %s693 = scalar_lea.vmem %s7, %s692
        // Predicated region
        $region53: #{cola_forward.3} parent=47 // pred_check
          %p694 = pneg %p194
        $region54: #{cola_forward.3} parent=47 // pred_check_branch
          %696 = sbr.rel (%p694) target = $region56
        $region55: #{cola_forward.3} parent=47 // pred_region
          _
        $region56: #{cola_forward.3} parent=47 // pred_fallthru
          _
      $region48: #{cola_forward.3} parent=5 // pred_fallthru
        _
      %p697 = scmp.le.s32.totalorder 2, %s14
      // Predicated region
      $region57: #{cola_forward.3} parent=5 // pred_check
        %p698 = pneg %p697
      $region58: #{cola_forward.3} parent=5 // pred_check_branch
        %700 = sbr.rel (%p698) target = $region60
      $region59: #{cola_forward.3} parent=5 // pred_region
        %s701 = ssub.s32 %s14, 2
        // Predicated region
        $region61: #{cola_forward.3} parent=59 // pred_check
          %p702 = pneg %p200
        $region62: #{cola_forward.3} parent=59 // pred_check_branch
          %704 = sbr.rel (%p702) target = $region64
        $region63: #{cola_forward.3} parent=59 // pred_region
          %p705 = scmp.lt.s32.totalorder %s20, 1
          %s706 = scalar_select %p705, %s20, 1
          %s707 = smul.addr %s706, 8
          %s708 = scalar_lea.vmem %s7, %s707
        $region64: #{cola_forward.3} parent=59 // pred_fallthru
          _
      $region60: #{cola_forward.3} parent=5 // pred_fallthru
        _
    $region6: #{cola_forward.3} parent=1 // loop_footer
      %s18 = sadd.s32 1, %s14
    $region7: #{cola_forward.3} parent=1 // loop_footer_branch
      %13 = sbr.rel target = $region3
    $region8: #{cola_forward.3} parent=1 // loop_exit
      _
    %709 = vsyncpa [#allocation3], 1
    %s710 = scalar_lea.sflag [#allocation3], 1
    %711 = vsyncpa %s710, 1

// kernel: cola_forward.2
$region0: #{cola_forward.2}
  #allocation0 [shape = 'u32[]', space=smem, size = 0x4, offset = 0x4, fixed_abs, tag = 'smem constant byte address 0x4 - core index']
  #allocation1 [shape = 'u32[144,128]{1,0:T(1,128)}', space=vmem, size = 0x12000, scoped, tag = 'internal scratch']
  %s0 = inlined_call_operand.vmem [shape: f32[8,32], index: 0, kind: input, shape index: {}]
  %s1 = inlined_call_operand.vmem [shape: f32[32,32], index: 1, kind: input, shape index: {}]
  %s2 = inlined_call_operand.vmem [shape: f32[1,32], index: 2, kind: input, shape index: {}]
  %s3 = inlined_call_operand.vmem [shape: f32[32,32], index: 3, kind: input, shape index: {}]
  %s4 = inlined_call_operand.vmem [shape: f32[2], index: 4, kind: input, shape index: {}]
  %s5 = inlined_call_operand.vmem [shape: f32[8,32], index: 5, kind: output, shape index: {}]
  %s6 = sld [smem:[#allocation0]]
  $region34: #{cola_forward.2} parent=0
    _
  %s8 = ssub.s32 1, %s6
  %s9 = scalar_select 0, %s8, %s6
  $region1: #{cola_forward.2} parent=0
    #allocation2 [shape = 'u8[512]{0}', space=smem, size = 0x200, scoped, tag = 'input window, operand 4, single buffered']
    #allocation3 [shape = 's32[1]{0}', space=sflag, size = 0x4, scoped, tag = 'scoped memory for cola_forward.2']
    %10 = vsyncpa [#allocation3], 0
    // Predicated region
    $region2: #{cola_forward.2} parent=1 // pred_check
      _
    $region3: #{cola_forward.2} parent=1 // pred_check_branch
      %12 = sbr.rel (0) target = $region5
    $region4: #{cola_forward.2} parent=1 // pred_region
      _
    $region5: #{cola_forward.2} parent=1 // pred_fallthru
      _
    // Predicated region
    $region6: #{cola_forward.2} parent=1 // pred_check
      _
    $region7: #{cola_forward.2} parent=1 // pred_check_branch
      %14 = sbr.rel (0) target = $region9
    $region8: #{cola_forward.2} parent=1 // pred_region
      _
    $region9: #{cola_forward.2} parent=1 // pred_fallthru
      _
    // Predicated region
    $region10: #{cola_forward.2} parent=1 // pred_check
      _
    $region11: #{cola_forward.2} parent=1 // pred_check_branch
      %16 = sbr.rel (0) target = $region13
    $region12: #{cola_forward.2} parent=1 // pred_region
      _
    $region13: #{cola_forward.2} parent=1 // pred_fallthru
      _
    // Predicated region
    $region14: #{cola_forward.2} parent=1 // pred_check
      _
    $region15: #{cola_forward.2} parent=1 // pred_check_branch
      %18 = sbr.rel (0) target = $region17
    $region16: #{cola_forward.2} parent=1 // pred_region
      _
    $region17: #{cola_forward.2} parent=1 // pred_fallthru
      _
    // Predicated region
    $region18: #{cola_forward.2} parent=1 // pred_check
      _
    $region19: #{cola_forward.2} parent=1 // pred_check_branch
      %20 = sbr.rel (0) target = $region21
    $region20: #{cola_forward.2} parent=1 // pred_region
      %s22 = ssub.s32 16, 16
      %23 = vsyncadd [#allocation3], %s22
      %s25 = sshll.u32 %s4, 4
      %s26 = int_to_ptr.vmem [resolvable:$true] %s25
      %28 = dma.vmem_to_smem %s26, 16, [#allocation2], [#allocation3]
    $region21: #{cola_forward.2} parent=1 // pred_fallthru
      _
    // Predicated region
    $region22: #{cola_forward.2} parent=1 // pred_check
      _
    $region23: #{cola_forward.2} parent=1 // pred_check_branch
      %30 = sbr.rel (0) target = $region25
    $region24: #{cola_forward.2} parent=1 // pred_region
      %31 = dma.done [#allocation3], 16
    $region25: #{cola_forward.2} parent=1 // pred_fallthru
      _
    %32 = sfence
    %s33 = sld [smem:[#allocation2]]
    %v34 = vld [vmem:[%s0] sm:$0xff]
    %v35 = vld [vmem:[%s1] sm:$0xff]
    %v36 = vld [vmem:[%s1 + $0x8] sm:$0xff]
    %v37 = vld [vmem:[%s1 + $0x10] sm:$0xff]
    %v38 = vld [vmem:[%s1 + $0x18] sm:$0xff]
    %v39 = vld [vmem:[%s2] sm:$0x1]
    %v41 = vlaneseq
    %v42 = vshrl.u32 %v41, 7
    %v43 = vsub.s32 0, %v42
    %v44 = vrot.slane %v39, %v43
    %vm46 = vcmask 261120
    %v48 = vsel %vm46, %v34, 0
    %50 = vmatprep.subr.mxu0 0.0
    %51 = vmatpush1.msra.mxu0 %v35
    %52 = vmatprep.subr.mxu0 0.0
    %53 = vmatpush1.msra.mxu0 %v36
    %54 = vmatprep.subr.mxu0 0.0
    %55 = vmatpush1.msra.mxu0 %v37
    %56 = vmatprep.subr.mxu0 0.0
    %57 = vmatpush1.msra.mxu0 %v38
    %58 = vmatprep.subr.mxu0 0.0
    %59 = vmatpush1.msra.mxu0 0.0
    %60 = vmatprep.subr.mxu0 0.0
    %61 = vmatpush1.msra.mxu0 0.0
    %62 = vmatprep.subr.mxu0 0.0
    %63 = vmatpush1.msra.mxu0 0.0
    %64 = vmatprep.subr.mxu0 0.0
    %65 = vmatpush1.msra.mxu0 0.0
    %66 = vmatprep.subr.mxu0 0.0
    %67 = vmatpush1.msra.mxu0 0.0
    %68 = vmatprep.subr.mxu0 0.0
    %69 = vmatpush1.msra.mxu0 0.0
    %70 = vmatprep.subr.mxu0 0.0
    %71 = vmatpush1.msra.mxu0 0.0
    %72 = vmatprep.subr.mxu0 0.0
    %73 = vmatpush1.msra.mxu0 0.0
    %74 = vmatprep.subr.mxu0 0.0
    %75 = vmatpush1.msra.mxu0 0.0
    %76 = vmatprep.subr.mxu0 0.0
    %77 = vmatpush1.msra.mxu0 0.0
    %78 = vmatprep.subr.mxu0 0.0
    %79 = vmatpush1.msra.mxu0 0.0
    %80 = vmatprep.subr.mxu0 0.0
    %81 = vmatpush1.msra.mxu0 0.0
    %82 = vmatprep.subr.mxu0 0.0
    %83 = vmatpush1.msra.mxu0 0.0
    %84 = vmatprep.subr.mxu0 0.0
    %85 = vmatpush1.msra.mxu0 0.0
    %86 = vmatprep.subr.mxu0 0.0
    %87 = vmatpush1.msra.mxu0 0.0
    %88 = vmatprep.subr.mxu0 0.0
    %89 = vmatpush1.msra.mxu0 0.0
    %90 = vmatprep.subr.mxu0 0.0
    %91 = vmatpush1.msra.mxu0 0.0
    %92 = vmatprep.subr.mxu0 0.0
    %93 = vmatpush1.msra.mxu0 0.0
    %94 = vmatprep.subr.mxu0 0.0
    %95 = vmatpush1.msra.mxu0 0.0
    %96 = vmatprep.subr.mxu0 0.0
    %97 = vmatpush1.msra.mxu0 0.0
    %98 = vmatprep.subr.mxu0 0.0
    %99 = vmatpush1.msra.mxu0 0.0
    %100 = vmatprep.subr.mxu0 0.0
    %101 = vmatpush1.msra.mxu0 0.0
    %102 = vmatprep.subr.mxu0 0.0
    %103 = vmatpush1.msra.mxu0 0.0
    %104 = vmatprep.subr.mxu0 0.0
    %105 = vmatpush1.msra.mxu0 0.0
    %106 = vmatprep.subr.mxu0 0.0
    %107 = vmatpush1.msra.mxu0 0.0
    %108 = vmatprep.subr.mxu0 0.0
    %109 = vmatpush1.msra.mxu0 0.0
    %110 = vmatprep.subr.mxu0 0.0
    %111 = vmatpush1.msra.mxu0 0.0
    %112 = vmatprep.subr.mxu0 0.0
    %113 = vmatpush1.msra.mxu0 0.0
    %114 = vmatprep.mubr.f32.mxu0 0.0
    %115 = vmatmul.mubr.f32.gmra.mrb[0].mxu0 %v48
    %v116 = vpop.f32.mrb[0].mxu0
    %v117 = vadd.f32 %v44, %v116
    %v118 = vpop.f32.mrb[0].mxu0
    %119 = vdwg.mxu0
    %vm120 = vcmp.gt.f32.partialorder %v117, 0.0
    %v121 = vstv %s33
    %v122 = vmul.f32 %v121, %v117
    %v123 = vsel %vm120, %v117, %v122
    %v124 = vmul.f32 %v123, %v123
    %v125 = vsel %vm46, %v124, 0.0
    %126 = vadd.xlane.f32.xlu0 %v125
    %v127 = vpop.xlane.xlu0 %126
    %v128 = vmax.f32 %v127, 1e-24
    %v129 = vrsqrt.pop %v128
    %v130 = vmul.f32 %v123, %v129
    %v131 = vld [vmem:[%s3] sm:$0xff]
    %v132 = vld [vmem:[%s3 + $0x8] sm:$0xff]
    %v133 = vld [vmem:[%s3 + $0x10] sm:$0xff]
    %v134 = vld [vmem:[%s3 + $0x18] sm:$0xff]
    %v136 = vsel %vm46, %v130, 0
    %138 = vmatprep.subr.mxu0 0.0
    %139 = vmatpush1.msra.mxu0 %v131
    %140 = vmatprep.subr.mxu0 0.0
    %141 = vmatpush1.msra.mxu0 %v132
    %142 = vmatprep.subr.mxu0 0.0
    %143 = vmatpush1.msra.mxu0 %v133
    %144 = vmatprep.subr.mxu0 0.0
    %145 = vmatpush1.msra.mxu0 %v134
    %146 = vmatprep.subr.mxu0 0.0
    %147 = vmatpush1.msra.mxu0 0.0
    %148 = vmatprep.subr.mxu0 0.0
    %149 = vmatpush1.msra.mxu0 0.0
    %150 = vmatprep.subr.mxu0 0.0
    %151 = vmatpush1.msra.mxu0 0.0
    %152 = vmatprep.subr.mxu0 0.0
    %153 = vmatpush1.msra.mxu0 0.0
    %154 = vmatprep.subr.mxu0 0.0
    %155 = vmatpush1.msra.mxu0 0.0
    %156 = vmatprep.subr.mxu0 0.0
    %157 = vmatpush1.msra.mxu0 0.0
    %158 = vmatprep.subr.mxu0 0.0
    %159 = vmatpush1.msra.mxu0 0.0
    %160 = vmatprep.subr.mxu0 0.0
    %161 = vmatpush1.msra.mxu0 0.0
    %162 = vmatprep.subr.mxu0 0.0
    %163 = vmatpush1.msra.mxu0 0.0
    %164 = vmatprep.subr.mxu0 0.0
    %165 = vmatpush1.msra.mxu0 0.0
    %166 = vmatprep.subr.mxu0 0.0
    %167 = vmatpush1.msra.mxu0 0.0
    %168 = vmatprep.subr.mxu0 0.0
    %169 = vmatpush1.msra.mxu0 0.0
    %170 = vmatprep.subr.mxu0 0.0
    %171 = vmatpush1.msra.mxu0 0.0
    %172 = vmatprep.subr.mxu0 0.0
    %173 = vmatpush1.msra.mxu0 0.0
    %174 = vmatprep.subr.mxu0 0.0
    %175 = vmatpush1.msra.mxu0 0.0
    %176 = vmatprep.subr.mxu0 0.0
    %177 = vmatpush1.msra.mxu0 0.0
    %178 = vmatprep.subr.mxu0 0.0
    %179 = vmatpush1.msra.mxu0 0.0
    %180 = vmatprep.subr.mxu0 0.0
    %181 = vmatpush1.msra.mxu0 0.0
    %182 = vmatprep.subr.mxu0 0.0
    %183 = vmatpush1.msra.mxu0 0.0
    %184 = vmatprep.subr.mxu0 0.0
    %185 = vmatpush1.msra.mxu0 0.0
    %186 = vmatprep.subr.mxu0 0.0
    %187 = vmatpush1.msra.mxu0 0.0
    %188 = vmatprep.subr.mxu0 0.0
    %189 = vmatpush1.msra.mxu0 0.0
    %190 = vmatprep.subr.mxu0 0.0
    %191 = vmatpush1.msra.mxu0 0.0
    %192 = vmatprep.subr.mxu0 0.0
    %193 = vmatpush1.msra.mxu0 0.0
    %194 = vmatprep.subr.mxu0 0.0
    %195 = vmatpush1.msra.mxu0 0.0
    %196 = vmatprep.subr.mxu0 0.0
    %197 = vmatpush1.msra.mxu0 0.0
    %198 = vmatprep.subr.mxu0 0.0
    %199 = vmatpush1.msra.mxu0 0.0
    %200 = vmatprep.subr.mxu0 0.0
    %201 = vmatpush1.msra.mxu0 0.0
    %202 = vmatprep.mubr.f32.mxu0 0.0
    %203 = vmatmul.mubr.f32.gmra.mrb[0].mxu0 %v136
    %v204 = vpop.f32.mrb[0].mxu0
    %v205 = vadd.f32 0.0, %v204
    %v206 = vpop.f32.mrb[0].mxu0
    %207 = vdwg.mxu0
    %208 = vst.msk [vmem:[%s5] sm:$0xff] %vm46, %v205
    // Predicated region
    $region26: #{cola_forward.2} parent=1 // pred_check
      _
    $region27: #{cola_forward.2} parent=1 // pred_check_branch
      %210 = sbr.rel (0) target = $region29
    $region28: #{cola_forward.2} parent=1 // pred_region
      _
    $region29: #{cola_forward.2} parent=1 // pred_fallthru
      _
    // Predicated region
    $region30: #{cola_forward.2} parent=1 // pred_check
      _
    $region31: #{cola_forward.2} parent=1 // pred_check_branch
      %212 = sbr.rel (0) target = $region33
    $region32: #{cola_forward.2} parent=1 // pred_region
      _
    $region33: #{cola_forward.2} parent=1 // pred_fallthru
      _
    %213 = vsyncpa [#allocation3], 1

</llo_original>
